<compile_context>
chip_gen: v6e
topology: v6e:2x2x1
jax: 0.10.0
libtpu: 0.0.40
codegen_flags: <defaults>
</compile_context>

<pallas_src>
import jax
import jax.numpy as jnp
from jax.experimental import pallas as pl
from jax.experimental.pallas import tpu as pltpu

LANE = 128


def _round_up(x, m):
    return (x + m - 1) // m * m


def actor_kernel(x_ref, w1_ref, b1_ref, w2_ref, b2_ref,
                 w3_ref, b3_ref, w4_ref, b4_ref, out_ref):
    # x tile: (TILE_B, K_PAD) bf16; weights bf16; biases f32.
    x = x_ref[...]

    # fc1 + relu  (dropout = identity at eval)
    h1 = jnp.dot(x, w1_ref[...], preferred_element_type=jnp.float32) + b1_ref[...]
    h1 = jnp.maximum(h1, 0.0)

    # fc2 + relu  (dropout = identity at eval)
    h2 = jnp.dot(h1.astype(jnp.bfloat16), w2_ref[...],
                 preferred_element_type=jnp.float32) + b2_ref[...]
    h2 = jnp.maximum(h2, 0.0)

    # fc3 + relu (output lanes zero-padded to 128 -> lane-dense h3)
    h3 = jnp.dot(h2.astype(jnp.bfloat16), w3_ref[...],
                 preferred_element_type=jnp.float32) + b3_ref[...]
    h3 = jnp.maximum(h3, 0.0)

    # fc4: padded output lanes carry bias -1e30 (zero weights), so they vanish in
    # the softmax without any in-kernel masking.
    logits = jnp.dot(h3.astype(jnp.bfloat16), w4_ref[...],
                     preferred_element_type=jnp.float32) + b4_ref[...]

    m = jnp.max(logits, axis=-1, keepdims=True)
    e = jnp.exp(logits - m)
    denom = jnp.sum(e, axis=-1, keepdims=True)
    # EUP approx reciprocal: rows sum to 1 within ~1e-3 (fine for action probs).
    out_ref[...] = e * pl.reciprocal(denom, approx=True)


def actor_forward(x, params, *, tile_b=2048):
    w1, b1, w2, b2, w3, b3, w4, b4 = params
    B, state_dim = x.shape
    h1d, h2d, h3d = w1.shape[1], w2.shape[1], w3.shape[1]   # 256, 128, 64
    action_dim = w4.shape[1]

    K_PAD = _round_up(state_dim, LANE)       # lane-dense contraction for fc1
    H3_PAD = _round_up(h3d, LANE)            # lane-dense h3 / fc4 contraction
    N_PAD = _round_up(action_dim, LANE)      # lane-dense output (unmasked vst)

    if B <= 256:
        # Small-batch / RL-inference path: pad only to sublane granularity.
        TILE_B = _round_up(B, 8)
    else:
        # >= 2 grid steps so the "parallel" axis shards across v7x's 2 TCs.
        TILE_B = min(tile_b, _round_up(pl.cdiv(B, 2), 256))
    B_PAD = _round_up(B, TILE_B)
    nb = B_PAD // TILE_B

    bf = jnp.bfloat16

    # --- wrapper-side padding / casts (cast first, pad once in bf16) ---
    xp = jnp.pad(x.astype(bf), ((0, B_PAD - B), (0, K_PAD - state_dim)))
    w1p = jnp.pad(w1.astype(bf), ((0, K_PAD - state_dim), (0, 0)))
    w2b = w2.astype(bf)
    w3p = jnp.pad(w3.astype(bf), ((0, 0), (0, H3_PAD - h3d)))
    b3p = jnp.pad(b3, ((0, 0), (0, H3_PAD - h3d)))
    w4p = jnp.pad(w4.astype(bf), ((0, H3_PAD - h3d), (0, N_PAD - action_dim)))
    # f32 bias carries the padded-lane mask (-1e30); keep in f32 so the sentinel
    # is representable.
    b4p = jnp.full((1, N_PAD), -1e30, jnp.float32).at[:, :action_dim].set(b4)

    x_spec = pl.BlockSpec((TILE_B, K_PAD), lambda i: (i, 0))
    out_spec = pl.BlockSpec((TILE_B, N_PAD), lambda i: (i, 0))
    resident = lambda shape: pl.BlockSpec(shape, lambda i: (0, 0))  # VMEM-resident

    flops = 2 * B_PAD * (K_PAD * h1d + h1d * h2d + h2d * H3_PAD + H3_PAD * N_PAD)
    transcendentals = B_PAD * (N_PAD + 1)  # exp + reciprocal
    bytes_accessed = (
        B_PAD * K_PAD * 2 + B_PAD * N_PAD * 4
        + (K_PAD * h1d + h1d * h2d + h2d * H3_PAD + H3_PAD * N_PAD) * 2
        + (h1d + h2d + H3_PAD + N_PAD) * 4
    )

    out_padded = pl.pallas_call(
        actor_kernel,
        out_shape=jax.ShapeDtypeStruct((B_PAD, N_PAD), jnp.float32),
        grid=(nb,),
        in_specs=[
            x_spec,
            resident(w1p.shape), resident(b1.shape),
            resident(w2b.shape), resident(b2.shape),
            resident(w3p.shape), resident(b3p.shape),
            resident(w4p.shape), resident(b4p.shape),
        ],
        out_specs=out_spec,
        compiler_params=pltpu.CompilerParams(
            dimension_semantics=("parallel",),
        ),
        cost_estimate=pl.CostEstimate(
            flops=flops,
            transcendentals=transcendentals,
            bytes_accessed=bytes_accessed,
        ),
    )(xp, w1p, b1, w2b, b2, w3p, b3p, w4p, b4p)

    # Fuses into the consumer when this wrapper is jitted; consumers that can read
    # the padded (B_PAD, N_PAD) buffer directly should do so instead.
    return out_padded[:B, :action_dim]


def init_params(key, state_dim, action_dim):
    """Deterministic init matching nn.Linear default (uniform(-1/sqrt(in), 1/sqrt(in)))."""
    dims = [(state_dim, 256), (256, 128), (128, 64), (64, action_dim)]
    params = []
    for (fan_in, fan_out) in dims:
        key, kw, kb = jax.random.split(key, 3)
        bound = 1.0 / jnp.sqrt(float(fan_in))
        w = jax.random.uniform(kw, (fan_in, fan_out), jnp.float32, -bound, bound)
        b = jax.random.uniform(kb, (1, fan_out), jnp.float32, -bound, bound)
        params += [w, b]
    return params


def _ref_forward(x, params):
    """Pure-JAX reference at matching (bf16-matmul / f32-accumulate) precision."""
    w1, b1, w2, b2, w3, b3, w4, b4 = params
    bf = jnp.bfloat16
    h = jnp.maximum(jnp.dot(x.astype(bf), w1.astype(bf),
                            preferred_element_type=jnp.float32) + b1, 0.0)
    h = jnp.maximum(jnp.dot(h.astype(bf), w2.astype(bf),
                            preferred_element_type=jnp.float32) + b2, 0.0)
    h = jnp.maximum(jnp.dot(h.astype(bf), w3.astype(bf),
                            preferred_element_type=jnp.float32) + b3, 0.0)
    logits = jnp.dot(h.astype(bf), w4.astype(bf),
                     preferred_element_type=jnp.float32) + b4
    return jax.nn.softmax(logits, axis=-1)


if __name__ == "__main__":
    key = jax.random.PRNGKey(0)
    batch, state_dim, action_dim = 2, 32, 8

    key, kx = jax.random.split(key)
    x = jax.random.normal(kx, (batch, state_dim), jnp.float32)
    params = init_params(key, state_dim, action_dim)

    fwd = jax.jit(actor_forward)
    out = fwd(x, params)
    out = jax.block_until_ready(out)

    ref = _ref_forward(x, params)

    assert out.shape == (batch, action_dim)
    assert bool(jnp.all(jnp.isfinite(out)))
    # rows sum to ~1 (approx-reciprocal softmax)
    assert jnp.allclose(jnp.sum(out, axis=-1), 1.0, atol=5e-3)
    # matches bf16/f32-accumulate reference
    assert jnp.allclose(out, ref, atol=2e-2)

    print("KERNEL_OK")
</pallas_src>

<mosaic_0001>
module attributes {stable_mosaic.version = 11 : i64} {
  func.func @actor_kernel(%arg0: i32, %arg1: memref<8x128xbf16, #tpu.memory_space<vmem>>, %arg2: memref<128x256xbf16, #tpu.memory_space<vmem>>, %arg3: memref<1x256xf32, #tpu.memory_space<vmem>>, %arg4: memref<256x128xbf16, #tpu.memory_space<vmem>>, %arg5: memref<1x128xf32, #tpu.memory_space<vmem>>, %arg6: memref<128x128xbf16, #tpu.memory_space<vmem>>, %arg7: memref<1x128xf32, #tpu.memory_space<vmem>>, %arg8: memref<128x128xbf16, #tpu.memory_space<vmem>>, %arg9: memref<1x128xf32, #tpu.memory_space<vmem>>, %arg10: memref<8x128xf32, #tpu.memory_space<vmem>>) attributes {dimension_semantics = [#tpu.dimension_semantics<parallel>], iteration_bounds = array<i64: 1>, scalar_prefetch = 0 : i64, scratch_operands = 0 : i64, tpu.core_type = #tpu.core_type<tc>, window_params = [{transform_indices = @transform_0, window_bounds = array<i64: 8, 128>}, {pipeline_mode = #tpu.pipeline_mode<synchronous>, transform_indices = @transform_1, window_bounds = array<i64: 128, 256>}, {pipeline_mode = #tpu.pipeline_mode<synchronous>, transform_indices = @transform_2, window_bounds = array<i64: 1, 256>}, {pipeline_mode = #tpu.pipeline_mode<synchronous>, transform_indices = @transform_3, window_bounds = array<i64: 256, 128>}, {pipeline_mode = #tpu.pipeline_mode<synchronous>, transform_indices = @transform_4, window_bounds = array<i64: 1, 128>}, {pipeline_mode = #tpu.pipeline_mode<synchronous>, transform_indices = @transform_5, window_bounds = array<i64: 128, 128>}, {pipeline_mode = #tpu.pipeline_mode<synchronous>, transform_indices = @transform_6, window_bounds = array<i64: 1, 128>}, {pipeline_mode = #tpu.pipeline_mode<synchronous>, transform_indices = @transform_7, window_bounds = array<i64: 128, 128>}, {pipeline_mode = #tpu.pipeline_mode<synchronous>, transform_indices = @transform_8, window_bounds = array<i64: 1, 128>}, {transform_indices = @transform_9, window_bounds = array<i64: 8, 128>}]} {
    %c0 = arith.constant 0 : index
    %c0_0 = arith.constant 0 : index
    %0 = vector.load %arg1[%c0, %c0_0] : memref<8x128xbf16, #tpu.memory_space<vmem>>, vector<8x128xbf16>
    %c0_1 = arith.constant 0 : index
    %c0_2 = arith.constant 0 : index
    %1 = vector.load %arg2[%c0_1, %c0_2] : memref<128x256xbf16, #tpu.memory_space<vmem>>, vector<128x256xbf16>
    %cst = arith.constant dense<0.000000e+00> : vector<8x256xf32>
    %2 = tpu.matmul %0, %1, %cst {dimension_numbers = #tpu.dot_dimension_numbers<[1], [0], [0], [1], [0, 0, 1, 1], [], []>} : vector<8x128xbf16>, vector<128x256xbf16>, vector<8x256xf32> -> vector<8x256xf32>
    %c0_3 = arith.constant 0 : index
    %c0_4 = arith.constant 0 : index
    %3 = vector.load %arg3[%c0_3, %c0_4] : memref<1x256xf32, #tpu.memory_space<vmem>>, vector<1x256xf32>
    %4 = vector.broadcast %3 : vector<1x256xf32> to vector<8x256xf32>
    %5 = arith.addf %2, %4 : vector<8x256xf32>
    %cst_5 = arith.constant 0.000000e+00 : f32
    %6 = vector.broadcast %cst_5 : f32 to vector<8x256xf32>
    %7 = arith.maximumf %5, %6 : vector<8x256xf32>
    %8 = arith.truncf %7 : vector<8x256xf32> to vector<8x256xbf16>
    %c0_6 = arith.constant 0 : index
    %c0_7 = arith.constant 0 : index
    %9 = vector.load %arg4[%c0_6, %c0_7] : memref<256x128xbf16, #tpu.memory_space<vmem>>, vector<256x128xbf16>
    %cst_8 = arith.constant dense<0.000000e+00> : vector<8x128xf32>
    %10 = tpu.matmul %8, %9, %cst_8 {dimension_numbers = #tpu.dot_dimension_numbers<[1], [0], [0], [1], [0, 0, 1, 1], [], []>} : vector<8x256xbf16>, vector<256x128xbf16>, vector<8x128xf32> -> vector<8x128xf32>
    %c0_9 = arith.constant 0 : index
    %c0_10 = arith.constant 0 : index
    %11 = vector.load %arg5[%c0_9, %c0_10] : memref<1x128xf32, #tpu.memory_space<vmem>>, vector<1x128xf32>
    %12 = vector.broadcast %11 : vector<1x128xf32> to vector<8x128xf32>
    %13 = arith.addf %10, %12 : vector<8x128xf32>
    %cst_11 = arith.constant 0.000000e+00 : f32
    %14 = vector.broadcast %cst_11 : f32 to vector<8x128xf32>
    %15 = arith.maximumf %13, %14 : vector<8x128xf32>
    %16 = arith.truncf %15 : vector<8x128xf32> to vector<8x128xbf16>
    %c0_12 = arith.constant 0 : index
    %c0_13 = arith.constant 0 : index
    %17 = vector.load %arg6[%c0_12, %c0_13] : memref<128x128xbf16, #tpu.memory_space<vmem>>, vector<128x128xbf16>
    %cst_14 = arith.constant dense<0.000000e+00> : vector<8x128xf32>
    %18 = tpu.matmul %16, %17, %cst_14 {dimension_numbers = #tpu.dot_dimension_numbers<[1], [0], [0], [1], [0, 0, 1, 1], [], []>} : vector<8x128xbf16>, vector<128x128xbf16>, vector<8x128xf32> -> vector<8x128xf32>
    %c0_15 = arith.constant 0 : index
    %c0_16 = arith.constant 0 : index
    %19 = vector.load %arg7[%c0_15, %c0_16] : memref<1x128xf32, #tpu.memory_space<vmem>>, vector<1x128xf32>
    %20 = vector.broadcast %19 : vector<1x128xf32> to vector<8x128xf32>
    %21 = arith.addf %18, %20 : vector<8x128xf32>
    %cst_17 = arith.constant 0.000000e+00 : f32
    %22 = vector.broadcast %cst_17 : f32 to vector<8x128xf32>
    %23 = arith.maximumf %21, %22 : vector<8x128xf32>
    %24 = arith.truncf %23 : vector<8x128xf32> to vector<8x128xbf16>
    %c0_18 = arith.constant 0 : index
    %c0_19 = arith.constant 0 : index
    %25 = vector.load %arg8[%c0_18, %c0_19] : memref<128x128xbf16, #tpu.memory_space<vmem>>, vector<128x128xbf16>
    %cst_20 = arith.constant dense<0.000000e+00> : vector<8x128xf32>
    %26 = tpu.matmul %24, %25, %cst_20 {dimension_numbers = #tpu.dot_dimension_numbers<[1], [0], [0], [1], [0, 0, 1, 1], [], []>} : vector<8x128xbf16>, vector<128x128xbf16>, vector<8x128xf32> -> vector<8x128xf32>
    %c0_21 = arith.constant 0 : index
    %c0_22 = arith.constant 0 : index
    %27 = vector.load %arg9[%c0_21, %c0_22] : memref<1x128xf32, #tpu.memory_space<vmem>>, vector<1x128xf32>
    %28 = vector.broadcast %27 : vector<1x128xf32> to vector<8x128xf32>
    %29 = arith.addf %26, %28 : vector<8x128xf32>
    %cst_23 = arith.constant dense<0xFF800000> : vector<8xf32>
    %30 = vector.multi_reduction <maximumf>, %29, %cst_23 [1] : vector<8x128xf32> to vector<8xf32>
    %31 = vector.shape_cast %30 : vector<8xf32> to vector<8x1xf32>
    %32 = vector.broadcast %31 : vector<8x1xf32> to vector<8x128xf32>
    %33 = arith.subf %29, %32 : vector<8x128xf32>
    %34 = math.exp %33 : vector<8x128xf32>
    %cst_24 = arith.constant dense<0.000000e+00> : vector<8xf32>
    %35 = vector.multi_reduction <add>, %34, %cst_24 [1] : vector<8x128xf32> to vector<8xf32>
    %36 = vector.shape_cast %35 : vector<8xf32> to vector<8x1xf32>
    %37 = tpu.reciprocal %36 {approx = true} : vector<8x1xf32> -> vector<8x1xf32>
    %38 = vector.broadcast %37 : vector<8x1xf32> to vector<8x128xf32>
    %39 = arith.mulf %34, %38 : vector<8x128xf32>
    %c0_25 = arith.constant 0 : index
    %c0_26 = arith.constant 0 : index
    %40 = vector.load %arg10[%c0_25, %c0_26] : memref<8x128xf32, #tpu.memory_space<vmem>>, vector<8x128xf32>
    tpu.vector_store %arg10[%c0_25, %c0_26], %39 {strides = array<i32>} : memref<8x128xf32, #tpu.memory_space<vmem>>, vector<8x128xf32>,
    return
  }
  func.func @transform_0(%arg0: i32) -> (i32, i32) {
    %c0_i32 = arith.constant 0 : i32
    %c0_i32_0 = arith.constant 0 : i32
    return %arg0, %c0_i32 : i32, i32
  }
  func.func @transform_1(%arg0: i32) -> (i32, i32) {
    %c0_i32 = arith.constant 0 : i32
    %c0_i32_0 = arith.constant 0 : i32
    %c0_i32_1 = arith.constant 0 : i32
    return %c0_i32, %c0_i32_0 : i32, i32
  }
  func.func @transform_2(%arg0: i32) -> (i32, i32) {
    %c0_i32 = arith.constant 0 : i32
    %c0_i32_0 = arith.constant 0 : i32
    %c0_i32_1 = arith.constant 0 : i32
    return %c0_i32, %c0_i32_0 : i32, i32
  }
  func.func @transform_3(%arg0: i32) -> (i32, i32) {
    %c0_i32 = arith.constant 0 : i32
    %c0_i32_0 = arith.constant 0 : i32
    %c0_i32_1 = arith.constant 0 : i32
    return %c0_i32, %c0_i32_0 : i32, i32
  }
  func.func @transform_4(%arg0: i32) -> (i32, i32) {
    %c0_i32 = arith.constant 0 : i32
    %c0_i32_0 = arith.constant 0 : i32
    %c0_i32_1 = arith.constant 0 : i32
    return %c0_i32, %c0_i32_0 : i32, i32
  }
  func.func @transform_5(%arg0: i32) -> (i32, i32) {
    %c0_i32 = arith.constant 0 : i32
    %c0_i32_0 = arith.constant 0 : i32
    %c0_i32_1 = arith.constant 0 : i32
    return %c0_i32, %c0_i32_0 : i32, i32
  }
  func.func @transform_6(%arg0: i32) -> (i32, i32) {
    %c0_i32 = arith.constant 0 : i32
    %c0_i32_0 = arith.constant 0 : i32
    %c0_i32_1 = arith.constant 0 : i32
    return %c0_i32, %c0_i32_0 : i32, i32
  }
  func.func @transform_7(%arg0: i32) -> (i32, i32) {
    %c0_i32 = arith.constant 0 : i32
    %c0_i32_0 = arith.constant 0 : i32
    %c0_i32_1 = arith.constant 0 : i32
    return %c0_i32, %c0_i32_0 : i32, i32
  }
  func.func @transform_8(%arg0: i32) -> (i32, i32) {
    %c0_i32 = arith.constant 0 : i32
    %c0_i32_0 = arith.constant 0 : i32
    %c0_i32_1 = arith.constant 0 : i32
    return %c0_i32, %c0_i32_0 : i32, i32
  }
  func.func @transform_9(%arg0: i32) -> (i32, i32) {
    %c0_i32 = arith.constant 0 : i32
    %c0_i32_0 = arith.constant 0 : i32
    return %arg0, %c0_i32 : i32, i32
  }
}

</mosaic_0001>

<llo_original>
// kernel: actor_forward.1
$region0: #{actor_forward.1}
  #allocation0 [shape = 'u32[]', space=smem, size = 0x4, offset = 0x4, fixed_abs, tag = 'smem constant byte address 0x4 - core index']
  #allocation1 [shape = 'u32[144,128]{1,0:T(1,128)}', space=vmem, size = 0x12000, scoped, tag = 'internal scratch']
  %s0 = inlined_call_operand.vmem [shape: bf16[8,128], index: 0, kind: input, shape index: {}]
  %s1 = inlined_call_operand.vmem [shape: bf16[128,256], index: 1, kind: input, shape index: {}]
  %s2 = inlined_call_operand.vmem [shape: f32[1,256], index: 2, kind: input, shape index: {}]
  %s3 = inlined_call_operand.vmem [shape: bf16[256,128], index: 3, kind: input, shape index: {}]
  %s4 = inlined_call_operand.vmem [shape: f32[1,128], index: 4, kind: input, shape index: {}]
  %s5 = inlined_call_operand.vmem [shape: bf16[128,128], index: 5, kind: input, shape index: {}]
  %s6 = inlined_call_operand.vmem [shape: f32[1,128], index: 6, kind: input, shape index: {}]
  %s7 = inlined_call_operand.vmem [shape: bf16[128,128], index: 7, kind: input, shape index: {}]
  %s8 = inlined_call_operand.vmem [shape: f32[1,128], index: 8, kind: input, shape index: {}]
  %s9 = inlined_call_operand.vmem [shape: f32[8,128], index: 9, kind: output, shape index: {}]
  %s10 = sld [smem:[#allocation0]]
  $region46: #{actor_forward.1} parent=0
    _
  %s12 = ssub.s32 1, %s10
  %s13 = scalar_select 0, %s12, %s10
  // Predicated region
  $region2: #{actor_forward.1} parent=0 // pred_check
    _
  $region3: #{actor_forward.1} parent=0 // pred_check_branch
    %15 = sbr.rel (0) target = $region5
  $region4: #{actor_forward.1} parent=0 // pred_region
    _
  $region5: #{actor_forward.1} parent=0 // pred_fallthru
    _
  // Predicated region
  $region6: #{actor_forward.1} parent=0 // pred_check
    _
  $region7: #{actor_forward.1} parent=0 // pred_check_branch
    %17 = sbr.rel (0) target = $region9
  $region8: #{actor_forward.1} parent=0 // pred_region
    _
  $region9: #{actor_forward.1} parent=0 // pred_fallthru
    _
  // Predicated region
  $region10: #{actor_forward.1} parent=0 // pred_check
    _
  $region11: #{actor_forward.1} parent=0 // pred_check_branch
    %19 = sbr.rel (0) target = $region13
  $region12: #{actor_forward.1} parent=0 // pred_region
    _
  $region13: #{actor_forward.1} parent=0 // pred_fallthru
    _
  // Predicated region
  $region14: #{actor_forward.1} parent=0 // pred_check
    _
  $region15: #{actor_forward.1} parent=0 // pred_check_branch
    %21 = sbr.rel (0) target = $region17
  $region16: #{actor_forward.1} parent=0 // pred_region
    _
  $region17: #{actor_forward.1} parent=0 // pred_fallthru
    _
  // Predicated region
  $region18: #{actor_forward.1} parent=0 // pred_check
    _
  $region19: #{actor_forward.1} parent=0 // pred_check_branch
    %23 = sbr.rel (0) target = $region21
  $region20: #{actor_forward.1} parent=0 // pred_region
    _
  $region21: #{actor_forward.1} parent=0 // pred_fallthru
    _
  // Predicated region
  $region22: #{actor_forward.1} parent=0 // pred_check
    _
  $region23: #{actor_forward.1} parent=0 // pred_check_branch
    %25 = sbr.rel (0) target = $region25
  $region24: #{actor_forward.1} parent=0 // pred_region
    _
  $region25: #{actor_forward.1} parent=0 // pred_fallthru
    _
  // Predicated region
  $region26: #{actor_forward.1} parent=0 // pred_check
    _
  $region27: #{actor_forward.1} parent=0 // pred_check_branch
    %27 = sbr.rel (0) target = $region29
  $region28: #{actor_forward.1} parent=0 // pred_region
    _
  $region29: #{actor_forward.1} parent=0 // pred_fallthru
    _
  // Predicated region
  $region30: #{actor_forward.1} parent=0 // pred_check
    _
  $region31: #{actor_forward.1} parent=0 // pred_check_branch
    %29 = sbr.rel (0) target = $region33
  $region32: #{actor_forward.1} parent=0 // pred_region
    _
  $region33: #{actor_forward.1} parent=0 // pred_fallthru
    _
  // Predicated region
  $region34: #{actor_forward.1} parent=0 // pred_check
    _
  $region35: #{actor_forward.1} parent=0 // pred_check_branch
    %31 = sbr.rel (0) target = $region37
  $region36: #{actor_forward.1} parent=0 // pred_region
    _
  $region37: #{actor_forward.1} parent=0 // pred_fallthru
    _
  %v33 = vld [vmem:[%s0] sm:$0xf]
  %v34 = vld [vmem:[%s1] sm:$0xff]
  %v35 = vld [vmem:[%s1 + $0x8] sm:$0xff]
  %v36 = vld [vmem:[%s1 + $0x10] sm:$0xff]
  %v37 = vld [vmem:[%s1 + $0x18] sm:$0xff]
  %v38 = vld [vmem:[%s1 + $0x20] sm:$0xff]
  %v39 = vld [vmem:[%s1 + $0x28] sm:$0xff]
  %v40 = vld [vmem:[%s1 + $0x30] sm:$0xff]
  %v41 = vld [vmem:[%s1 + $0x38] sm:$0xff]
  %v42 = vld [vmem:[%s1 + $0x40] sm:$0xff]
  %v43 = vld [vmem:[%s1 + $0x48] sm:$0xff]
  %v44 = vld [vmem:[%s1 + $0x50] sm:$0xff]
  %v45 = vld [vmem:[%s1 + $0x58] sm:$0xff]
  %v46 = vld [vmem:[%s1 + $0x60] sm:$0xff]
  %v47 = vld [vmem:[%s1 + $0x68] sm:$0xff]
  %v48 = vld [vmem:[%s1 + $0x70] sm:$0xff]
  %v49 = vld [vmem:[%s1 + $0x78] sm:$0xff]
  %v50 = vld [vmem:[%s2] sm:$0x3]
  %v52 = vlaneseq
  %v53 = vshrl.u32 %v52, 7
  %v54 = vsub.s32 0, %v53
  %v55 = vrot.slane %v50, %v54
  %v56 = vlaneseq
  %v57 = vshrl.u32 %v56, 7
  %v58 = vsub.s32 1, %v57
  %v59 = vrot.slane %v50, %v58
  %v78 = vunpack.c.l.b16 %v34
  %v79 = vunpack.c.h.b16 %v34
  %v80 = vunpack.c.l.b16 %v35
  %v81 = vunpack.c.h.b16 %v35
  %v82 = vunpack.c.l.b16 %v36
  %v83 = vunpack.c.h.b16 %v36
  %v84 = vunpack.c.l.b16 %v37
  %v85 = vunpack.c.h.b16 %v37
  %v86 = vunpack.c.l.b16 %v38
  %v87 = vunpack.c.h.b16 %v38
  %v88 = vunpack.c.l.b16 %v39
  %v89 = vunpack.c.h.b16 %v39
  %v90 = vunpack.c.l.b16 %v40
  %v91 = vunpack.c.h.b16 %v40
  %v92 = vunpack.c.l.b16 %v41
  %v93 = vunpack.c.h.b16 %v41
  %v94 = vunpack.c.l.b16 %v42
  %v95 = vunpack.c.h.b16 %v42
  %v96 = vunpack.c.l.b16 %v43
  %v97 = vunpack.c.h.b16 %v43
  %v98 = vunpack.c.l.b16 %v44
  %v99 = vunpack.c.h.b16 %v44
  %v100 = vunpack.c.l.b16 %v45
  %v101 = vunpack.c.h.b16 %v45
  %v102 = vunpack.c.l.b16 %v46
  %v103 = vunpack.c.h.b16 %v46
  %v104 = vunpack.c.l.b16 %v47
  %v105 = vunpack.c.h.b16 %v47
  %v106 = vunpack.c.l.b16 %v48
  %v107 = vunpack.c.h.b16 %v48
  %v108 = vunpack.c.l.b16 %v49
  %v109 = vunpack.c.h.b16 %v49
  %v110 = vpack.c.b16 %v80, %v78
  %v111 = vpack.c.b16 %v81, %v79
  %v112 = vpack.c.b16 %v84, %v82
  %v113 = vpack.c.b16 %v85, %v83
  %v114 = vpack.c.b16 %v88, %v86
  %v115 = vpack.c.b16 %v89, %v87
  %v116 = vpack.c.b16 %v92, %v90
  %v117 = vpack.c.b16 %v93, %v91
  %v118 = vpack.c.b16 %v96, %v94
  %v119 = vpack.c.b16 %v97, %v95
  %v120 = vpack.c.b16 %v100, %v98
  %v121 = vpack.c.b16 %v101, %v99
  %v122 = vpack.c.b16 %v104, %v102
  %v123 = vpack.c.b16 %v105, %v103
  %v124 = vpack.c.b16 %v108, %v106
  %v125 = vpack.c.b16 %v109, %v107
  %142 = vmatprep.subr.bf16.mxu0 %v125
  %143 = vmatpush1.bf16.msra.mxu0 %v124
  %144 = vmatprep.subr.bf16.mxu0 %v123
  %145 = vmatpush1.bf16.msra.mxu0 %v122
  %146 = vmatprep.subr.bf16.mxu0 %v121
  %147 = vmatpush1.bf16.msra.mxu0 %v120
  %148 = vmatprep.subr.bf16.mxu0 %v119
  %149 = vmatpush1.bf16.msra.mxu0 %v118
  %150 = vmatprep.subr.bf16.mxu0 %v117
  %151 = vmatpush1.bf16.msra.mxu0 %v116
  %152 = vmatprep.subr.bf16.mxu0 %v115
  %153 = vmatpush1.bf16.msra.mxu0 %v114
  %154 = vmatprep.subr.bf16.mxu0 %v113
  %155 = vmatpush1.bf16.msra.mxu0 %v112
  %156 = vmatprep.subr.bf16.mxu0 %v111
  %157 = vmatpush1.bf16.msra.mxu0 %v110
  %158 = vmatprep.subr.bf16.mxu0 0
  %159 = vmatpush2.bf16.msra.mxu0 0
  %160 = vmatprep.subr.bf16.mxu0 0
  %161 = vmatpush2.bf16.msra.mxu0 0
  %162 = vmatprep.subr.bf16.mxu0 0
  %163 = vmatpush2.bf16.msra.mxu0 0
  %164 = vmatprep.subr.bf16.mxu0 0
  %165 = vmatpush2.bf16.msra.mxu0 0
  %166 = vmatprep.subr.bf16.mxu0 0
  %167 = vmatpush2.bf16.msra.mxu0 0
  %168 = vmatprep.subr.bf16.mxu0 0
  %169 = vmatpush2.bf16.msra.mxu0 0
  %170 = vmatprep.subr.bf16.mxu0 0
  %171 = vmatpush2.bf16.msra.mxu0 0
  %172 = vmatprep.subr.bf16.mxu0 0
  %173 = vmatpush2.bf16.msra.mxu0 0
  %174 = vmatprep.mubr.bf16.mxu0 0
  %175 = vmatmul.mubr.bf16.gmra.mxu0 %v33
  %v176 = vpop.f32.mrf.mxu0
  %v177 = vadd.f32 %v55, %v176
  %v178 = vpop.f32.mrf.mxu0
  %v179 = vadd.f32 %v59, %v178
  %v180 = vpop.f32.mrf.mxu0
  %v181 = vpop.f32.mrf.mxu0
  %182 = vdwg.mxu0
  %v183 = vmax.f32 %v177, 0.0
  %v184 = vmax.f32 %v179, 0.0
  %v185 = vpack.c.bf16 %v183, %v183
  %v186 = vpack.c.bf16 %v184, %v184
  %v187 = vld [vmem:[%s3] sm:$0xf]
  %v188 = vld [vmem:[%s3 + $0x4] sm:$0xf]
  %v189 = vld [vmem:[%s3 + $0x8] sm:$0xf]
  %v190 = vld [vmem:[%s3 + $0xc] sm:$0xf]
  %v191 = vld [vmem:[%s3 + $0x10] sm:$0xf]
  %v192 = vld [vmem:[%s3 + $0x14] sm:$0xf]
  %v193 = vld [vmem:[%s3 + $0x18] sm:$0xf]
  %v194 = vld [vmem:[%s3 + $0x1c] sm:$0xf]
  %v195 = vld [vmem:[%s3 + $0x20] sm:$0xf]
  %v196 = vld [vmem:[%s3 + $0x24] sm:$0xf]
  %v197 = vld [vmem:[%s3 + $0x28] sm:$0xf]
  %v198 = vld [vmem:[%s3 + $0x2c] sm:$0xf]
  %v199 = vld [vmem:[%s3 + $0x30] sm:$0xf]
  %v200 = vld [vmem:[%s3 + $0x34] sm:$0xf]
  %v201 = vld [vmem:[%s3 + $0x38] sm:$0xf]
  %v202 = vld [vmem:[%s3 + $0x3c] sm:$0xf]
  %v203 = vld [vmem:[%s3 + $0x40] sm:$0xf]
  %v204 = vld [vmem:[%s3 + $0x44] sm:$0xf]
  %v205 = vld [vmem:[%s3 + $0x48] sm:$0xf]
  %v206 = vld [vmem:[%s3 + $0x4c] sm:$0xf]
  %v207 = vld [vmem:[%s3 + $0x50] sm:$0xf]
  %v208 = vld [vmem:[%s3 + $0x54] sm:$0xf]
  %v209 = vld [vmem:[%s3 + $0x58] sm:$0xf]
  %v210 = vld [vmem:[%s3 + $0x5c] sm:$0xf]
  %v211 = vld [vmem:[%s3 + $0x60] sm:$0xf]
  %v212 = vld [vmem:[%s3 + $0x64] sm:$0xf]
  %v213 = vld [vmem:[%s3 + $0x68] sm:$0xf]
  %v214 = vld [vmem:[%s3 + $0x6c] sm:$0xf]
  %v215 = vld [vmem:[%s3 + $0x70] sm:$0xf]
  %v216 = vld [vmem:[%s3 + $0x74] sm:$0xf]
  %v217 = vld [vmem:[%s3 + $0x78] sm:$0xf]
  %v218 = vld [vmem:[%s3 + $0x7c] sm:$0xf]
  %v219 = vld [vmem:[%s4] sm:$0x1]
  %v221 = vlaneseq
  %v222 = vshrl.u32 %v221, 7
  %v223 = vsub.s32 0, %v222
  %v224 = vrot.slane %v219, %v223
  %v258 = vunpack.c.l.b16 %v187
  %v259 = vunpack.c.l.b16 %v188
  %v260 = vunpack.c.l.b16 %v189
  %v261 = vunpack.c.l.b16 %v190
  %v262 = vunpack.c.l.b16 %v191
  %v263 = vunpack.c.l.b16 %v192
  %v264 = vunpack.c.l.b16 %v193
  %v265 = vunpack.c.l.b16 %v194
  %v266 = vunpack.c.l.b16 %v195
  %v267 = vunpack.c.l.b16 %v196
  %v268 = vunpack.c.l.b16 %v197
  %v269 = vunpack.c.l.b16 %v198
  %v270 = vunpack.c.l.b16 %v199
  %v271 = vunpack.c.l.b16 %v200
  %v272 = vunpack.c.l.b16 %v201
  %v273 = vunpack.c.l.b16 %v202
  %v274 = vunpack.c.l.b16 %v203
  %v275 = vunpack.c.l.b16 %v204
  %v276 = vunpack.c.l.b16 %v205
  %v277 = vunpack.c.l.b16 %v206
  %v278 = vunpack.c.l.b16 %v207
  %v279 = vunpack.c.l.b16 %v208
  %v280 = vunpack.c.l.b16 %v209
  %v281 = vunpack.c.l.b16 %v210
  %v282 = vunpack.c.l.b16 %v211
  %v283 = vunpack.c.l.b16 %v212
  %v284 = vunpack.c.l.b16 %v213
  %v285 = vunpack.c.l.b16 %v214
  %v286 = vunpack.c.l.b16 %v215
  %v287 = vunpack.c.l.b16 %v216
  %v288 = vunpack.c.l.b16 %v217
  %v289 = vunpack.c.l.b16 %v218
  %v290 = vpack.c.b16 %v259, %v258
  %v291 = vpack.c.b16 %v261, %v260
  %v292 = vpack.c.b16 %v263, %v262
  %v293 = vpack.c.b16 %v265, %v264
  %v294 = vpack.c.b16 %v267, %v266
  %v295 = vpack.c.b16 %v269, %v268
  %v296 = vpack.c.b16 %v271, %v270
  %v297 = vpack.c.b16 %v273, %v272
  %v298 = vpack.c.b16 %v275, %v274
  %v299 = vpack.c.b16 %v277, %v276
  %v300 = vpack.c.b16 %v279, %v278
  %v301 = vpack.c.b16 %v281, %v280
  %v302 = vpack.c.b16 %v283, %v282
  %v303 = vpack.c.b16 %v285, %v284
  %v304 = vpack.c.b16 %v287, %v286
  %v305 = vpack.c.b16 %v289, %v288
  %322 = vmatprep.subr.bf16.mxu0 0
  %323 = vmatpush1.bf16.msra.mxu0 %v297
  %324 = vmatprep.subr.bf16.mxu0 0
  %325 = vmatpush1.bf16.msra.mxu0 %v296
  %326 = vmatprep.subr.bf16.mxu0 0
  %327 = vmatpush1.bf16.msra.mxu0 %v295
  %328 = vmatprep.subr.bf16.mxu0 0
  %329 = vmatpush1.bf16.msra.mxu0 %v294
  %330 = vmatprep.subr.bf16.mxu0 0
  %331 = vmatpush1.bf16.msra.mxu0 %v293
  %332 = vmatprep.subr.bf16.mxu0 0
  %333 = vmatpush1.bf16.msra.mxu0 %v292
  %334 = vmatprep.subr.bf16.mxu0 0
  %335 = vmatpush1.bf16.msra.mxu0 %v291
  %336 = vmatprep.subr.bf16.mxu0 0
  %337 = vmatpush1.bf16.msra.mxu0 %v290
  %338 = vmatprep.subr.bf16.mxu0 0
  %339 = vmatpush2.bf16.msra.mxu0 %v305
  %340 = vmatprep.subr.bf16.mxu0 0
  %341 = vmatpush2.bf16.msra.mxu0 %v304
  %342 = vmatprep.subr.bf16.mxu0 0
  %343 = vmatpush2.bf16.msra.mxu0 %v303
  %344 = vmatprep.subr.bf16.mxu0 0
  %345 = vmatpush2.bf16.msra.mxu0 %v302
  %346 = vmatprep.subr.bf16.mxu0 0
  %347 = vmatpush2.bf16.msra.mxu0 %v301
  %348 = vmatprep.subr.bf16.mxu0 0
  %349 = vmatpush2.bf16.msra.mxu0 %v300
  %350 = vmatprep.subr.bf16.mxu0 0
  %351 = vmatpush2.bf16.msra.mxu0 %v299
  %352 = vmatprep.subr.bf16.mxu0 0
  %353 = vmatpush2.bf16.msra.mxu0 %v298
  %354 = vmatprep.mubr.bf16.mxu0 %v186
  %355 = vmatmul.mubr.bf16.gmra.mxu0 %v185
  %v356 = vpop.f32.mrf.mxu0
  %v357 = vadd.f32 %v224, %v356
  %v358 = vpop.f32.mrf.mxu0
  %v359 = vpop.f32.mrf.mxu0
  %v360 = vpop.f32.mrf.mxu0
  %361 = vdwg.mxu0
  %v362 = vmax.f32 %v357, 0.0
  %v363 = vpack.c.bf16 %v362, %v362
  %v364 = vld [vmem:[%s5] sm:$0xf]
  %v365 = vld [vmem:[%s5 + $0x4] sm:$0xf]
  %v366 = vld [vmem:[%s5 + $0x8] sm:$0xf]
  %v367 = vld [vmem:[%s5 + $0xc] sm:$0xf]
  %v368 = vld [vmem:[%s5 + $0x10] sm:$0xf]
  %v369 = vld [vmem:[%s5 + $0x14] sm:$0xf]
  %v370 = vld [vmem:[%s5 + $0x18] sm:$0xf]
  %v371 = vld [vmem:[%s5 + $0x1c] sm:$0xf]
  %v372 = vld [vmem:[%s5 + $0x20] sm:$0xf]
  %v373 = vld [vmem:[%s5 + $0x24] sm:$0xf]
  %v374 = vld [vmem:[%s5 + $0x28] sm:$0xf]
  %v375 = vld [vmem:[%s5 + $0x2c] sm:$0xf]
  %v376 = vld [vmem:[%s5 + $0x30] sm:$0xf]
  %v377 = vld [vmem:[%s5 + $0x34] sm:$0xf]
  %v378 = vld [vmem:[%s5 + $0x38] sm:$0xf]
  %v379 = vld [vmem:[%s5 + $0x3c] sm:$0xf]
  %v380 = vld [vmem:[%s6] sm:$0x1]
  %v382 = vlaneseq
  %v383 = vshrl.u32 %v382, 7
  %v384 = vsub.s32 0, %v383
  %v385 = vrot.slane %v380, %v384
  %v403 = vunpack.c.l.b16 %v364
  %v404 = vunpack.c.l.b16 %v365
  %v405 = vunpack.c.l.b16 %v366
  %v406 = vunpack.c.l.b16 %v367
  %v407 = vunpack.c.l.b16 %v368
  %v408 = vunpack.c.l.b16 %v369
  %v409 = vunpack.c.l.b16 %v370
  %v410 = vunpack.c.l.b16 %v371
  %v411 = vunpack.c.l.b16 %v372
  %v412 = vunpack.c.l.b16 %v373
  %v413 = vunpack.c.l.b16 %v374
  %v414 = vunpack.c.l.b16 %v375
  %v415 = vunpack.c.l.b16 %v376
  %v416 = vunpack.c.l.b16 %v377
  %v417 = vunpack.c.l.b16 %v378
  %v418 = vunpack.c.l.b16 %v379
  %v419 = vpack.c.b16 %v404, %v403
  %v420 = vpack.c.b16 %v406, %v405
  %v421 = vpack.c.b16 %v408, %v407
  %v422 = vpack.c.b16 %v410, %v409
  %v423 = vpack.c.b16 %v412, %v411
  %v424 = vpack.c.b16 %v414, %v413
  %v425 = vpack.c.b16 %v416, %v415
  %v426 = vpack.c.b16 %v418, %v417
  %435 = vmatprep.subr.bf16.mxu0 0
  %436 = vmatpush1.bf16.msra.mxu0 %v426
  %437 = vmatprep.subr.bf16.mxu0 0
  %438 = vmatpush1.bf16.msra.mxu0 %v425
  %439 = vmatprep.subr.bf16.mxu0 0
  %440 = vmatpush1.bf16.msra.mxu0 %v424
  %441 = vmatprep.subr.bf16.mxu0 0
  %442 = vmatpush1.bf16.msra.mxu0 %v423
  %443 = vmatprep.subr.bf16.mxu0 0
  %444 = vmatpush1.bf16.msra.mxu0 %v422
  %445 = vmatprep.subr.bf16.mxu0 0
  %446 = vmatpush1.bf16.msra.mxu0 %v421
  %447 = vmatprep.subr.bf16.mxu0 0
  %448 = vmatpush1.bf16.msra.mxu0 %v420
  %449 = vmatprep.subr.bf16.mxu0 0
  %450 = vmatpush1.bf16.msra.mxu0 %v419
  %451 = vmatprep.subr.bf16.mxu0 0
  %452 = vmatpush2.bf16.msra.mxu0 0
  %453 = vmatprep.subr.bf16.mxu0 0
  %454 = vmatpush2.bf16.msra.mxu0 0
  %455 = vmatprep.subr.bf16.mxu0 0
  %456 = vmatpush2.bf16.msra.mxu0 0
  %457 = vmatprep.subr.bf16.mxu0 0
  %458 = vmatpush2.bf16.msra.mxu0 0
  %459 = vmatprep.subr.bf16.mxu0 0
  %460 = vmatpush2.bf16.msra.mxu0 0
  %461 = vmatprep.subr.bf16.mxu0 0
  %462 = vmatpush2.bf16.msra.mxu0 0
  %463 = vmatprep.subr.bf16.mxu0 0
  %464 = vmatpush2.bf16.msra.mxu0 0
  %465 = vmatprep.subr.bf16.mxu0 0
  %466 = vmatpush2.bf16.msra.mxu0 0
  %467 = vmatprep.mubr.bf16.mxu0 0
  %468 = vmatmul.mubr.bf16.gmra.mxu0 %v363
  %v469 = vpop.f32.mrf.mxu0
  %v470 = vadd.f32 %v385, %v469
  %v471 = vpop.f32.mrf.mxu0
  %v472 = vpop.f32.mrf.mxu0
  %v473 = vpop.f32.mrf.mxu0
  %474 = vdwg.mxu0
  %v475 = vmax.f32 %v470, 0.0
  %v476 = vpack.c.bf16 %v475, %v475
  %v477 = vld [vmem:[%s7] sm:$0xf]
  %v478 = vld [vmem:[%s7 + $0x4] sm:$0xf]
  %v479 = vld [vmem:[%s7 + $0x8] sm:$0xf]
  %v480 = vld [vmem:[%s7 + $0xc] sm:$0xf]
  %v481 = vld [vmem:[%s7 + $0x10] sm:$0xf]
  %v482 = vld [vmem:[%s7 + $0x14] sm:$0xf]
  %v483 = vld [vmem:[%s7 + $0x18] sm:$0xf]
  %v484 = vld [vmem:[%s7 + $0x1c] sm:$0xf]
  %v485 = vld [vmem:[%s7 + $0x20] sm:$0xf]
  %v486 = vld [vmem:[%s7 + $0x24] sm:$0xf]
  %v487 = vld [vmem:[%s7 + $0x28] sm:$0xf]
  %v488 = vld [vmem:[%s7 + $0x2c] sm:$0xf]
  %v489 = vld [vmem:[%s7 + $0x30] sm:$0xf]
  %v490 = vld [vmem:[%s7 + $0x34] sm:$0xf]
  %v491 = vld [vmem:[%s7 + $0x38] sm:$0xf]
  %v492 = vld [vmem:[%s7 + $0x3c] sm:$0xf]
  %v493 = vld [vmem:[%s8] sm:$0x1]
  %v495 = vlaneseq
  %v496 = vshrl.u32 %v495, 7
  %v497 = vsub.s32 0, %v496
  %v498 = vrot.slane %v493, %v497
  %v516 = vunpack.c.l.b16 %v477
  %v517 = vunpack.c.l.b16 %v478
  %v518 = vunpack.c.l.b16 %v479
  %v519 = vunpack.c.l.b16 %v480
  %v520 = vunpack.c.l.b16 %v481
  %v521 = vunpack.c.l.b16 %v482
  %v522 = vunpack.c.l.b16 %v483
  %v523 = vunpack.c.l.b16 %v484
  %v524 = vunpack.c.l.b16 %v485
  %v525 = vunpack.c.l.b16 %v486
  %v526 = vunpack.c.l.b16 %v487
  %v527 = vunpack.c.l.b16 %v488
  %v528 = vunpack.c.l.b16 %v489
  %v529 = vunpack.c.l.b16 %v490
  %v530 = vunpack.c.l.b16 %v491
  %v531 = vunpack.c.l.b16 %v492
  %v532 = vpack.c.b16 %v517, %v516
  %v533 = vpack.c.b16 %v519, %v518
  %v534 = vpack.c.b16 %v521, %v520
  %v535 = vpack.c.b16 %v523, %v522
  %v536 = vpack.c.b16 %v525, %v524
  %v537 = vpack.c.b16 %v527, %v526
  %v538 = vpack.c.b16 %v529, %v528
  %v539 = vpack.c.b16 %v531, %v530
  %548 = vmatprep.subr.bf16.mxu0 0
  %549 = vmatpush1.bf16.msra.mxu0 %v539
  %550 = vmatprep.subr.bf16.mxu0 0
  %551 = vmatpush1.bf16.msra.mxu0 %v538
  %552 = vmatprep.subr.bf16.mxu0 0
  %553 = vmatpush1.bf16.msra.mxu0 %v537
  %554 = vmatprep.subr.bf16.mxu0 0
  %555 = vmatpush1.bf16.msra.mxu0 %v536
  %556 = vmatprep.subr.bf16.mxu0 0
  %557 = vmatpush1.bf16.msra.mxu0 %v535
  %558 = vmatprep.subr.bf16.mxu0 0
  %559 = vmatpush1.bf16.msra.mxu0 %v534
  %560 = vmatprep.subr.bf16.mxu0 0
  %561 = vmatpush1.bf16.msra.mxu0 %v533
  %562 = vmatprep.subr.bf16.mxu0 0
  %563 = vmatpush1.bf16.msra.mxu0 %v532
  %564 = vmatprep.subr.bf16.mxu0 0
  %565 = vmatpush2.bf16.msra.mxu0 0
  %566 = vmatprep.subr.bf16.mxu0 0
  %567 = vmatpush2.bf16.msra.mxu0 0
  %568 = vmatprep.subr.bf16.mxu0 0
  %569 = vmatpush2.bf16.msra.mxu0 0
  %570 = vmatprep.subr.bf16.mxu0 0
  %571 = vmatpush2.bf16.msra.mxu0 0
  %572 = vmatprep.subr.bf16.mxu0 0
  %573 = vmatpush2.bf16.msra.mxu0 0
  %574 = vmatprep.subr.bf16.mxu0 0
  %575 = vmatpush2.bf16.msra.mxu0 0
  %576 = vmatprep.subr.bf16.mxu0 0
  %577 = vmatpush2.bf16.msra.mxu0 0
  %578 = vmatprep.subr.bf16.mxu0 0
  %579 = vmatpush2.bf16.msra.mxu0 0
  %580 = vmatprep.mubr.bf16.mxu0 0
  %581 = vmatmul.mubr.bf16.gmra.mxu0 %v476
  %v582 = vpop.f32.mrf.mxu0
  %v583 = vadd.f32 %v498, %v582
  %v584 = vpop.f32.mrf.mxu0
  %v585 = vpop.f32.mrf.mxu0
  %v586 = vpop.f32.mrf.mxu0
  %587 = vdwg.mxu0
  %588 = vmax.xlane.f32.xlu0 %v583
  %v589 = vpop.xlane.xlu0 %588
  %v590 = vsub.f32 %v583, %v589
  %v591 = vmul.f32 %v590, 1.442695
  %v592 = vpow.pop %v591
  %593 = vadd.xlane.f32.xlu0 %v592
  %v594 = vpop.xlane.xlu0 %593
  %v595 = vrcp.pop %v594
  %v596 = vmul.f32 %v592, %v595
  %597 = vst [vmem:[%s9] sm:$0xff] %v596
  // Predicated region
  $region38: #{actor_forward.1} parent=0 // pred_check
    _
  $region39: #{actor_forward.1} parent=0 // pred_check_branch
    %599 = sbr.rel (0) target = $region41
  $region40: #{actor_forward.1} parent=0 // pred_region
    _
  $region41: #{actor_forward.1} parent=0 // pred_fallthru
    _
  // Predicated region
  $region42: #{actor_forward.1} parent=0 // pred_check
    _
  $region43: #{actor_forward.1} parent=0 // pred_check_branch
    %601 = sbr.rel (0) target = $region45
  $region44: #{actor_forward.1} parent=0 // pred_region
    _
  $region45: #{actor_forward.1} parent=0 // pred_fallthru
    _

</llo_original>
